<compile_context>
chip_gen: v6e
topology: v6e:2x2x1
jax: 0.10.0
libtpu: 0.0.40
codegen_flags: <defaults>
</compile_context>

<pallas_src>
import math

import jax
import jax.numpy as jnp
import numpy as np
from jax.experimental import pallas as pl
from jax.experimental.pallas import tpu as pltpu


def _packed_kernel(k_smem, x_ref, w_ref, b_ref, m_ref, o_ref):
  """Lane-packed path: 128-lane slabs hold 128//D batch rows each."""
  del k_smem                                     # k only drives the index_maps
  # Elementwise multiply in f32 on the VPU (exact; also handles bf16 x inputs).
  xw = x_ref[...].astype(jnp.float32) * w_ref[0]           # (tm, 128)
  # hi/lo bf16 split: bf16 inputs -> exact MXU products + f32 accumulation, so
  # the segmented reduction is accurate to ~2^-17 regardless of matmul precision.
  hi = xw.astype(jnp.bfloat16)
  lo = (xw - hi.astype(jnp.float32)).astype(jnp.bfloat16)
  # Block-diagonal 0/1 mask: sums each D-lane group and broadcasts the result
  # back to every lane of the group -> lane-dense bias-add / tanh / store.
  s = jnp.dot(hi, m_ref[...], preferred_element_type=jnp.float32)
  s = s + jnp.dot(lo, m_ref[...], preferred_element_type=jnp.float32)
  o_ref[...] = jnp.tanh(s + b_ref[0]).astype(o_ref.dtype)


def _fallback_kernel(k_smem, x_ref, w_ref, b_ref, o_ref):
  """Fallback for feature dims that do not divide 128 (no lane packing)."""
  # TODO(synk): lane-dense packing for D not dividing 128 (pad features to the
  # next power of two); this path keeps correctness but uses masked stores.
  del k_smem
  s = jnp.sum(x_ref[...].astype(jnp.float32) * w_ref[0], axis=-1, keepdims=True)
  o_ref[...] = jnp.tanh(s + b_ref[0]).astype(o_ref.dtype)


def _tile_rows(rows, block_rows):
  """Pick a row-tile that is 8-aligned, <= block_rows, and gives >=2 grid steps
  whenever there is enough work (so v7x's two TensorCores both get a share)."""
  if rows <= 8:
    return rows, 1                                   # block == full dim (legal)
  nsplits = max(2, math.ceil(rows / block_rows))
  tm = min(block_rows, max(8, math.ceil(math.ceil(rows / nsplits) / 8) * 8))
  tm = min(tm, rows)
  return tm, math.ceil(rows / tm)


def dynamics_reduced_forward(t, x, weights, bias, *, T=10.0, time_steps=10,
                             non_linearity="tanh", block_rows=2048):
  """Pallas equivalent of Dynamics_reduced.forward.

  x:       (B, input_dim)
  weights: (time_steps, input_dim)   (stacked nn.ParameterList)
  bias:    (time_steps, input_dim)
  """
  if non_linearity != "tanh":
    # TODO(synk): relu / sigmoid / leakyrelu / tanh_prime variants of the module.
    raise NotImplementedError("only the module default 'tanh' is implemented")

  B, D = x.shape
  dtype = x.dtype
  dt = T / time_steps

  # Time-step selection: trunc-toward-zero like Python int(); works for traced t.
  # (Clamp is a documented divergence: PyTorch would IndexError for t >= T.)
  k = (jnp.asarray(t, jnp.float32) / jnp.float32(dt)).astype(jnp.int32)
  k = jnp.clip(k, 0, time_steps - 1).reshape((1,))

  w_f32 = jnp.asarray(weights, jnp.float32)
  b_f32 = jnp.asarray(bias, jnp.float32)

  packable = D <= 128 and 128 % D == 0
  vmem_limit = 32 * 1024 * 1024

  if packable:
    npack = 128 // D
    lanes = 128
    # Packed row count; force >= 8 so blocks are 8-sublane aligned and matmul
    # M-dims are multiples of 8.  Padding (when needed) is tiny: at most
    # max(npack - 1, 8 * npack - B) extra rows; for B % npack == 0 and
    # B >= 8 * npack there is NO pad and NO output slice at all.
    rows = max(math.ceil(B / npack), 8)
    b_pack = rows * npack
    xp = x if b_pack == B else jnp.pad(x, ((0, b_pack - B), (0, 0)))
    xp = xp.reshape(rows, lanes)                    # free row-major reshape

    # Per-timestep weight/bias tiled along lanes (lane j -> feature j % D),
    # reshaped to (time_steps, 1, 128) so the BlockSpec dims are full/legal.
    wt = jnp.tile(w_f32, (1, npack)).reshape(time_steps, 1, lanes)
    bt = jnp.tile(b_f32, (1, npack)).reshape(time_steps, 1, lanes)

    # Constant 0/1 group-membership matrix (block diagonal), bf16 -> exact.
    gid = np.arange(lanes) // D
    mask = jnp.asarray(gid[:, None] == gid[None, :], dtype=jnp.bfloat16)

    tm, nsteps = _tile_rows(rows, block_rows)

    itemsize = jnp.dtype(dtype).itemsize
    cost = pl.CostEstimate(
        flops=4 * rows * lanes * lanes + 6 * rows * lanes,   # 2 matmuls + VPU
        transcendentals=rows * lanes,                         # tanh
        bytes_accessed=2 * rows * lanes * itemsize + lanes * lanes * 2,
    )

    out_p = pl.pallas_call(
        _packed_kernel,
        out_shape=jax.ShapeDtypeStruct((rows, lanes), dtype),
        grid_spec=pltpu.PrefetchScalarGridSpec(
            num_scalar_prefetch=1,
            grid=(nsteps,),
            in_specs=[
                pl.BlockSpec((tm, lanes), lambda i, k_ref: (i, 0)),
                pl.BlockSpec((1, 1, lanes), lambda i, k_ref: (k_ref[0], 0, 0)),
                pl.BlockSpec((1, 1, lanes), lambda i, k_ref: (k_ref[0], 0, 0)),
                pl.BlockSpec((lanes, lanes), lambda i, k_ref: (0, 0)),
            ],
            out_specs=pl.BlockSpec((tm, lanes), lambda i, k_ref: (i, 0)),
        ),
        compiler_params=pltpu.CompilerParams(
            dimension_semantics=("parallel",),     # v7x: shard batch over 2 TCs
            vmem_limit_bytes=vmem_limit,
        ),
        cost_estimate=cost,
    )(k, xp, wt, bt, mask)

    out = out_p.reshape(b_pack, D)                 # free reshape
    return out if b_pack == B else out[:B]

  # --- unpacked fallback: D does not divide 128 ---
  w3 = w_f32.reshape(time_steps, 1, D)
  b3 = b_f32.reshape(time_steps, 1, D)
  tm, nsteps = _tile_rows(B, block_rows)
  return pl.pallas_call(
      _fallback_kernel,
      out_shape=jax.ShapeDtypeStruct((B, D), dtype),
      grid_spec=pltpu.PrefetchScalarGridSpec(
          num_scalar_prefetch=1,
          grid=(nsteps,),
          in_specs=[
              pl.BlockSpec((tm, D), lambda i, k_ref: (i, 0)),
              pl.BlockSpec((1, 1, D), lambda i, k_ref: (k_ref[0], 0, 0)),
              pl.BlockSpec((1, 1, D), lambda i, k_ref: (k_ref[0], 0, 0)),
          ],
          out_specs=pl.BlockSpec((tm, D), lambda i, k_ref: (i, 0)),
      ),
      compiler_params=pltpu.CompilerParams(
          dimension_semantics=("parallel",),
          vmem_limit_bytes=vmem_limit,
      ),
  )(k, x, w3, b3)


if __name__ == "__main__":
  # Module configuration (small, consistent with the PyTorch __init__)
  data_dim = 32
  augment_dim = 0
  input_dim = data_dim + augment_dim
  T = 10.0
  time_steps = 10
  batch = 32
  t = 3.7                     # -> k = int(3.7 / 1.0) = 3

  key = jax.random.PRNGKey(0)
  kx, kw, kb = jax.random.split(key, 3)

  weights = jax.random.normal(kw, (time_steps, input_dim), dtype=jnp.float32)
  bias = jax.random.normal(kb, (time_steps, input_dim), dtype=jnp.float32)
  x = jax.random.normal(kx, (batch, input_dim), dtype=jnp.float32)

  out = dynamics_reduced_forward(t, x, weights, bias, T=T, time_steps=time_steps)
  out = jax.block_until_ready(out)

  # Pure-f32 reference (elementwise mul + sum == x @ w_k^T).
  k = min(int(t / (T / time_steps)), time_steps - 1)
  ref = jnp.tanh(
      jnp.sum(x * weights[k][None, :], axis=-1, keepdims=True) + bias[k][None, :])

  assert out.shape == (batch, input_dim)
  max_err = float(jnp.max(jnp.abs(out - ref)))
  assert jnp.allclose(out, ref, atol=1e-3, rtol=1e-3), max_err

  print("KERNEL_OK")
</pallas_src>

<mosaic_0001>
module attributes {stable_mosaic.version = 11 : i64} {
  func.func @_packed_kernel(%arg0: i32, %arg1: memref<1xi32, #tpu.memory_space<smem>>, %arg2: memref<8x128xf32, #tpu.memory_space<vmem>>, %arg3: memref<1x1x128xf32, #tpu.memory_space<vmem>>, %arg4: memref<1x1x128xf32, #tpu.memory_space<vmem>>, %arg5: memref<128x128xbf16, #tpu.memory_space<vmem>>, %arg6: memref<8x128xf32, #tpu.memory_space<vmem>>) attributes {dimension_semantics = [#tpu.dimension_semantics<parallel>], iteration_bounds = array<i64: 1>, scalar_prefetch = 1 : i64, scratch_operands = 0 : i64, tpu.core_type = #tpu.core_type<tc>, window_params = [{transform_indices = @transform_0, window_bounds = array<i64: 8, 128>}, {transform_indices = @transform_1, window_bounds = array<i64: 1, 1, 128>}, {transform_indices = @transform_2, window_bounds = array<i64: 1, 1, 128>}, {pipeline_mode = #tpu.pipeline_mode<synchronous>, transform_indices = @transform_3, window_bounds = array<i64: 128, 128>}, {transform_indices = @transform_4, window_bounds = array<i64: 8, 128>}]} {
    %c0 = arith.constant 0 : index
    %c0_0 = arith.constant 0 : index
    %0 = vector.load %arg2[%c0, %c0_0] : memref<8x128xf32, #tpu.memory_space<vmem>>, vector<8x128xf32>
    %c0_1 = arith.constant 0 : index
    %c0_2 = arith.constant 0 : index
    %c0_3 = arith.constant 0 : index
    %1 = vector.load %arg3[%c0_1, %c0_2, %c0_3] : memref<1x1x128xf32, #tpu.memory_space<vmem>>, vector<1x1x128xf32>
    %2 = vector.shape_cast %1 : vector<1x1x128xf32> to vector<1x128xf32>
    %3 = vector.broadcast %2 : vector<1x128xf32> to vector<8x128xf32>
    %4 = arith.mulf %0, %3 : vector<8x128xf32>
    %5 = arith.truncf %4 : vector<8x128xf32> to vector<8x128xbf16>
    %6 = arith.extf %5 : vector<8x128xbf16> to vector<8x128xf32>
    %7 = arith.subf %4, %6 : vector<8x128xf32>
    %8 = arith.truncf %7 : vector<8x128xf32> to vector<8x128xbf16>
    %c0_4 = arith.constant 0 : index
    %c0_5 = arith.constant 0 : index
    %9 = vector.load %arg5[%c0_4, %c0_5] : memref<128x128xbf16, #tpu.memory_space<vmem>>, vector<128x128xbf16>
    %cst = arith.constant dense<0.000000e+00> : vector<8x128xf32>
    %10 = tpu.matmul %5, %9, %cst {dimension_numbers = #tpu.dot_dimension_numbers<[1], [0], [0], [1], [0, 0, 1, 1], [], []>} : vector<8x128xbf16>, vector<128x128xbf16>, vector<8x128xf32> -> vector<8x128xf32>
    %c0_6 = arith.constant 0 : index
    %c0_7 = arith.constant 0 : index
    %11 = vector.load %arg5[%c0_6, %c0_7] : memref<128x128xbf16, #tpu.memory_space<vmem>>, vector<128x128xbf16>
    %cst_8 = arith.constant dense<0.000000e+00> : vector<8x128xf32>
    %12 = tpu.matmul %8, %11, %cst_8 {dimension_numbers = #tpu.dot_dimension_numbers<[1], [0], [0], [1], [0, 0, 1, 1], [], []>} : vector<8x128xbf16>, vector<128x128xbf16>, vector<8x128xf32> -> vector<8x128xf32>
    %13 = arith.addf %10, %12 : vector<8x128xf32>
    %c0_9 = arith.constant 0 : index
    %c0_10 = arith.constant 0 : index
    %c0_11 = arith.constant 0 : index
    %14 = vector.load %arg4[%c0_9, %c0_10, %c0_11] : memref<1x1x128xf32, #tpu.memory_space<vmem>>, vector<1x1x128xf32>
    %15 = vector.shape_cast %14 : vector<1x1x128xf32> to vector<1x128xf32>
    %16 = vector.broadcast %15 : vector<1x128xf32> to vector<8x128xf32>
    %17 = arith.addf %13, %16 : vector<8x128xf32>
    %18 = math.tanh %17 : vector<8x128xf32>
    %c0_12 = arith.constant 0 : index
    %c0_13 = arith.constant 0 : index
    %19 = vector.load %arg6[%c0_12, %c0_13] : memref<8x128xf32, #tpu.memory_space<vmem>>, vector<8x128xf32>
    tpu.vector_store %arg6[%c0_12, %c0_13], %18 {strides = array<i32>} : memref<8x128xf32, #tpu.memory_space<vmem>>, vector<8x128xf32>,
    return
  }
  func.func @transform_0(%arg0: i32, %arg1: memref<1xi32, #tpu.memory_space<smem>>) -> (i32, i32) {
    %c0_i32 = arith.constant 0 : i32
    %c0_i32_0 = arith.constant 0 : i32
    return %arg0, %c0_i32 : i32, i32
  }
  func.func @transform_1(%arg0: i32, %arg1: memref<1xi32, #tpu.memory_space<smem>>) -> (i32, i32, i32) {
    %c0 = arith.constant 0 : index
    %0 = memref.load %arg1[%c0] : memref<1xi32, #tpu.memory_space<smem>>
    %c0_i32 = arith.constant 0 : i32
    %c0_i32_0 = arith.constant 0 : i32
    %c0_i32_1 = arith.constant 0 : i32
    return %0, %c0_i32, %c0_i32_0 : i32, i32, i32
  }
  func.func @transform_2(%arg0: i32, %arg1: memref<1xi32, #tpu.memory_space<smem>>) -> (i32, i32, i32) {
    %c0 = arith.constant 0 : index
    %0 = memref.load %arg1[%c0] : memref<1xi32, #tpu.memory_space<smem>>
    %c0_i32 = arith.constant 0 : i32
    %c0_i32_0 = arith.constant 0 : i32
    %c0_i32_1 = arith.constant 0 : i32
    return %0, %c0_i32, %c0_i32_0 : i32, i32, i32
  }
  func.func @transform_3(%arg0: i32, %arg1: memref<1xi32, #tpu.memory_space<smem>>) -> (i32, i32) {
    %c0_i32 = arith.constant 0 : i32
    %c0_i32_0 = arith.constant 0 : i32
    %c0_i32_1 = arith.constant 0 : i32
    return %c0_i32, %c0_i32_0 : i32, i32
  }
  func.func @transform_4(%arg0: i32, %arg1: memref<1xi32, #tpu.memory_space<smem>>) -> (i32, i32) {
    %c0_i32 = arith.constant 0 : i32
    %c0_i32_0 = arith.constant 0 : i32
    return %arg0, %c0_i32 : i32, i32
  }
}

</mosaic_0001>

<llo_original>
// kernel: tpu_custom_call.1
$region0: #{tpu_custom_call.1}
  #allocation0 [shape = 'u32[]', space=smem, size = 0x4, offset = 0x4, fixed_abs, tag = 'smem constant byte address 0x4 - core index']
  #allocation1 [shape = 'u32[144,128]{1,0:T(1,128)}', space=vmem, size = 0x12000, scoped, tag = 'internal scratch']
  #allocation2 [shape = 's32[1]{0}', space=sflag, size = 0x4, scoped, tag = 'scoped memory for tpu_custom_call.1']
  #allocation3 [shape = 's32[1]{0:T(128)S(6)}', space=smem, size = 0x200, scoped, tag = 'prefetched SMEM operand 0']
  %s0 = inlined_call_operand.<no memory space> [shape: s32[1], index: 0, kind: input, shape index: {}]
  %s1 = inlined_call_operand.hbm [shape: f32[8,128], index: 1, kind: input, shape index: {}]
  %s2 = inlined_call_operand.hbm [shape: f32[10,1,128], index: 2, kind: input, shape index: {}]
  %s3 = inlined_call_operand.hbm [shape: f32[10,1,128], index: 3, kind: input, shape index: {}]
  %s4 = inlined_call_operand.hbm [shape: bf16[128,128], index: 4, kind: input, shape index: {}]
  %s5 = inlined_call_operand.hbm [shape: f32[8,128], index: 5, kind: output, shape index: {}]
  %s6 = sld [smem:[#allocation0]]
  $region42: #{tpu_custom_call.1} parent=0
    _
  %s8 = ssub.s32 1, %s6
  %s9 = scalar_select 0, %s8, %s6
  %10 = sst [smem:[#allocation3]] %s0
  $region1: #{tpu_custom_call.1} parent=0
    #allocation4 [shape = 'u8[4096]{0}', space=vmem, size = 0x1000, scoped, tag = 'input window, operand 1, single buffered']
    #allocation5 [shape = 's32[1]{0}', space=sflag, size = 0x4, scoped, tag = 'scoped memory for tpu_custom_call.1']
    #allocation6 [shape = 's32[1]{0}', space=sflag, size = 0x4, scoped, tag = 'scoped memory for tpu_custom_call.1']
    #allocation7 [shape = 'u8[512]{0}', space=vmem, size = 0x400, scoped, tag = 'input window, operand 2, single buffered']
    #allocation8 [shape = 's32[1]{0}', space=sflag, size = 0x4, scoped, tag = 'scoped memory for tpu_custom_call.1']
    #allocation9 [shape = 'u8[512]{0}', space=vmem, size = 0x400, scoped, tag = 'input window, operand 3, single buffered']
    #allocation10 [shape = 'u8[32768]{0}', space=vmem, size = 0x8000, scoped, tag = 'input window, operand 4, single buffered']
    #allocation11 [shape = 's32[1]{0}', space=sflag, size = 0x4, scoped, tag = 'scoped memory for tpu_custom_call.1']
    #allocation12 [shape = 'u8[4096]{0}', space=vmem, size = 0x1000, scoped, tag = 'output window, operand 0, single buffered']
    %11 = vsyncpa [#allocation5], 0
    %12 = vsyncpa [#allocation8], 0
    %13 = vsyncpa [#allocation11], 0
    %14 = vsyncpa [#allocation6], 0
    // Predicated region
    $region2: #{tpu_custom_call.1} parent=1 // pred_check
      _
    $region3: #{tpu_custom_call.1} parent=1 // pred_check_branch
      %16 = sbr.rel (0) target = $region5
    $region4: #{tpu_custom_call.1} parent=1 // pred_region
      %s18 = ssub.s32 128, 128
      %19 = vsyncadd [#allocation5], %s18
      %s21 = sshll.u32 [#allocation4], 4
      %s22 = int_to_ptr.vmem [resolvable:$true] %s21
      %24 = dma.hbm_to_vmem [thread:$0]  %s1, 128, %s22, [#allocation5]
    $region5: #{tpu_custom_call.1} parent=1 // pred_fallthru
      _
    // Predicated region
    $region6: #{tpu_custom_call.1} parent=1 // pred_check
      _
    $region7: #{tpu_custom_call.1} parent=1 // pred_check_branch
      %26 = sbr.rel (0) target = $region9
    $region8: #{tpu_custom_call.1} parent=1 // pred_region
      %s27 = sld [smem:[#allocation3]]
      %s29 = ssub.s32 16, 16
      %30 = vsyncadd [#allocation8], %s29
      %s31 = smul.addr %s27, 16
      %s32 = scalar_lea.hbm %s2, %s31
      %s34 = sshll.u32 [#allocation7], 4
      %s35 = int_to_ptr.vmem [resolvable:$true] %s34
      %37 = dma.hbm_to_vmem [thread:$0]  %s32, 16, %s35, [#allocation8]
    $region9: #{tpu_custom_call.1} parent=1 // pred_fallthru
      _
    // Predicated region
    $region10: #{tpu_custom_call.1} parent=1 // pred_check
      _
    $region11: #{tpu_custom_call.1} parent=1 // pred_check_branch
      %39 = sbr.rel (0) target = $region13
    $region12: #{tpu_custom_call.1} parent=1 // pred_region
      %s40 = sld [smem:[#allocation3]]
      %s42 = ssub.s32 16, 16
      %43 = vsyncadd [#allocation8], %s42
      %s44 = smul.addr %s40, 16
      %s45 = scalar_lea.hbm %s3, %s44
      %s47 = sshll.u32 [#allocation9], 4
      %s48 = int_to_ptr.vmem [resolvable:$true] %s47
      %50 = dma.hbm_to_vmem [thread:$0]  %s45, 16, %s48, [#allocation8]
    $region13: #{tpu_custom_call.1} parent=1 // pred_fallthru
      _
    // Predicated region
    $region14: #{tpu_custom_call.1} parent=1 // pred_check
      _
    $region15: #{tpu_custom_call.1} parent=1 // pred_check_branch
      %52 = sbr.rel (0) target = $region17
    $region16: #{tpu_custom_call.1} parent=1 // pred_region
      %s54 = ssub.s32 1024, 1024
      %55 = vsyncadd [#allocation11], %s54
      %s56 = sshll.u32 [#allocation10], 4
      %s57 = int_to_ptr.vmem [resolvable:$true] %s56
      %62 = dma.hbm_to_vmem [thread:$0]  %s4, 1024, %s57, [#allocation11], 64, 64, 4
    $region17: #{tpu_custom_call.1} parent=1 // pred_fallthru
      _
    // Predicated region
    $region18: #{tpu_custom_call.1} parent=1 // pred_check
      _
    $region19: #{tpu_custom_call.1} parent=1 // pred_check_branch
      %64 = sbr.rel (0) target = $region21
    $region20: #{tpu_custom_call.1} parent=1 // pred_region
      %65 = dma.done [#allocation5], 128
    $region21: #{tpu_custom_call.1} parent=1 // pred_fallthru
      _
    // Predicated region
    $region22: #{tpu_custom_call.1} parent=1 // pred_check
      _
    $region23: #{tpu_custom_call.1} parent=1 // pred_check_branch
      %67 = sbr.rel (0) target = $region25
    $region24: #{tpu_custom_call.1} parent=1 // pred_region
      %68 = dma.done [#allocation8], 16
    $region25: #{tpu_custom_call.1} parent=1 // pred_fallthru
      _
    // Predicated region
    $region26: #{tpu_custom_call.1} parent=1 // pred_check
      _
    $region27: #{tpu_custom_call.1} parent=1 // pred_check_branch
      %70 = sbr.rel (0) target = $region29
    $region28: #{tpu_custom_call.1} parent=1 // pred_region
      %71 = dma.done [#allocation8], 16
    $region29: #{tpu_custom_call.1} parent=1 // pred_fallthru
      _
    // Predicated region
    $region30: #{tpu_custom_call.1} parent=1 // pred_check
      _
    $region31: #{tpu_custom_call.1} parent=1 // pred_check_branch
      %73 = sbr.rel (0) target = $region33
    $region32: #{tpu_custom_call.1} parent=1 // pred_region
      %74 = dma.done [#allocation11], 1024
    $region33: #{tpu_custom_call.1} parent=1 // pred_fallthru
      _
    %s75 = sld [smem:[#allocation3]]
    %s76 = sld [smem:[#allocation3]]
    %v78 = vld [vmem:[#allocation4] sm:$0xff]
    %v79 = vld [vmem:[#allocation7] sm:$0x1]
    %v81 = vlaneseq
    %v82 = vshrl.u32 %v81, 7
    %v83 = vsub.s32 0, %v82
    %v84 = vrot.slane %v79, %v83
    %v86 = vmul.f32 %v78, %v84
    %v87 = vpack.c.bf16 %v86, %v86
    %v88 = vunpack.c.l.bf16 %v87
    %v89 = vsub.f32 %v86, %v88
    %v90 = vpack.c.bf16 %v89, %v89
    %v91 = vld [vmem:[#allocation10] sm:$0xf]
    %v92 = vld [vmem:[#allocation10 + $0x4] sm:$0xf]
    %v93 = vld [vmem:[#allocation10 + $0x8] sm:$0xf]
    %v94 = vld [vmem:[#allocation10 + $0xc] sm:$0xf]
    %v95 = vld [vmem:[#allocation10 + $0x10] sm:$0xf]
    %v96 = vld [vmem:[#allocation10 + $0x14] sm:$0xf]
    %v97 = vld [vmem:[#allocation10 + $0x18] sm:$0xf]
    %v98 = vld [vmem:[#allocation10 + $0x1c] sm:$0xf]
    %v99 = vld [vmem:[#allocation10 + $0x20] sm:$0xf]
    %v100 = vld [vmem:[#allocation10 + $0x24] sm:$0xf]
    %v101 = vld [vmem:[#allocation10 + $0x28] sm:$0xf]
    %v102 = vld [vmem:[#allocation10 + $0x2c] sm:$0xf]
    %v103 = vld [vmem:[#allocation10 + $0x30] sm:$0xf]
    %v104 = vld [vmem:[#allocation10 + $0x34] sm:$0xf]
    %v105 = vld [vmem:[#allocation10 + $0x38] sm:$0xf]
    %v106 = vld [vmem:[#allocation10 + $0x3c] sm:$0xf]
    %v123 = vunpack.c.l.b16 %v91
    %v124 = vunpack.c.l.b16 %v92
    %v125 = vunpack.c.l.b16 %v93
    %v126 = vunpack.c.l.b16 %v94
    %v127 = vunpack.c.l.b16 %v95
    %v128 = vunpack.c.l.b16 %v96
    %v129 = vunpack.c.l.b16 %v97
    %v130 = vunpack.c.l.b16 %v98
    %v131 = vunpack.c.l.b16 %v99
    %v132 = vunpack.c.l.b16 %v100
    %v133 = vunpack.c.l.b16 %v101
    %v134 = vunpack.c.l.b16 %v102
    %v135 = vunpack.c.l.b16 %v103
    %v136 = vunpack.c.l.b16 %v104
    %v137 = vunpack.c.l.b16 %v105
    %v138 = vunpack.c.l.b16 %v106
    %v139 = vpack.c.b16 %v124, %v123
    %v140 = vpack.c.b16 %v126, %v125
    %v141 = vpack.c.b16 %v128, %v127
    %v142 = vpack.c.b16 %v130, %v129
    %v143 = vpack.c.b16 %v132, %v131
    %v144 = vpack.c.b16 %v134, %v133
    %v145 = vpack.c.b16 %v136, %v135
    %v146 = vpack.c.b16 %v138, %v137
    %155 = vmatprep.subr.bf16.mxu0 0
    %156 = vmatpush1.bf16.msra.mxu0 %v146
    %157 = vmatprep.subr.bf16.mxu0 0
    %158 = vmatpush1.bf16.msra.mxu0 %v145
    %159 = vmatprep.subr.bf16.mxu0 0
    %160 = vmatpush1.bf16.msra.mxu0 %v144
    %161 = vmatprep.subr.bf16.mxu0 0
    %162 = vmatpush1.bf16.msra.mxu0 %v143
    %163 = vmatprep.subr.bf16.mxu0 0
    %164 = vmatpush1.bf16.msra.mxu0 %v142
    %165 = vmatprep.subr.bf16.mxu0 0
    %166 = vmatpush1.bf16.msra.mxu0 %v141
    %167 = vmatprep.subr.bf16.mxu0 0
    %168 = vmatpush1.bf16.msra.mxu0 %v140
    %169 = vmatprep.subr.bf16.mxu0 0
    %170 = vmatpush1.bf16.msra.mxu0 %v139
    %171 = vmatprep.subr.bf16.mxu0 0
    %172 = vmatpush2.bf16.msra.mxu0 0
    %173 = vmatprep.subr.bf16.mxu0 0
    %174 = vmatpush2.bf16.msra.mxu0 0
    %175 = vmatprep.subr.bf16.mxu0 0
    %176 = vmatpush2.bf16.msra.mxu0 0
    %177 = vmatprep.subr.bf16.mxu0 0
    %178 = vmatpush2.bf16.msra.mxu0 0
    %179 = vmatprep.subr.bf16.mxu0 0
    %180 = vmatpush2.bf16.msra.mxu0 0
    %181 = vmatprep.subr.bf16.mxu0 0
    %182 = vmatpush2.bf16.msra.mxu0 0
    %183 = vmatprep.subr.bf16.mxu0 0
    %184 = vmatpush2.bf16.msra.mxu0 0
    %185 = vmatprep.subr.bf16.mxu0 0
    %186 = vmatpush2.bf16.msra.mxu0 0
    %187 = vmatprep.mubr.bf16.mxu0 0
    %188 = vmatmul.mubr.bf16.gmra.mxu0 %v90
    %v189 = vpop.f32.mrf.mxu0
    %v190 = vadd.f32 0.0, %v189
    %v191 = vpop.f32.mrf.mxu0
    %v192 = vpop.f32.mrf.mxu0
    %v193 = vpop.f32.mrf.mxu0
    %194 = vdwg.mxu0
    %195 = vmatprep.subr.bf16.mxu0 0
    %196 = vmatpush1.bf16.msra.mxu0 %v146
    %197 = vmatprep.subr.bf16.mxu0 0
    %198 = vmatpush1.bf16.msra.mxu0 %v145
    %199 = vmatprep.subr.bf16.mxu0 0
    %200 = vmatpush1.bf16.msra.mxu0 %v144
    %201 = vmatprep.subr.bf16.mxu0 0
    %202 = vmatpush1.bf16.msra.mxu0 %v143
    %203 = vmatprep.subr.bf16.mxu0 0
    %204 = vmatpush1.bf16.msra.mxu0 %v142
    %205 = vmatprep.subr.bf16.mxu0 0
    %206 = vmatpush1.bf16.msra.mxu0 %v141
    %207 = vmatprep.subr.bf16.mxu0 0
    %208 = vmatpush1.bf16.msra.mxu0 %v140
    %209 = vmatprep.subr.bf16.mxu0 0
    %210 = vmatpush1.bf16.msra.mxu0 %v139
    %211 = vmatprep.subr.bf16.mxu0 0
    %212 = vmatpush2.bf16.msra.mxu0 0
    %213 = vmatprep.subr.bf16.mxu0 0
    %214 = vmatpush2.bf16.msra.mxu0 0
    %215 = vmatprep.subr.bf16.mxu0 0
    %216 = vmatpush2.bf16.msra.mxu0 0
    %217 = vmatprep.subr.bf16.mxu0 0
    %218 = vmatpush2.bf16.msra.mxu0 0
    %219 = vmatprep.subr.bf16.mxu0 0
    %220 = vmatpush2.bf16.msra.mxu0 0
    %221 = vmatprep.subr.bf16.mxu0 0
    %222 = vmatpush2.bf16.msra.mxu0 0
    %223 = vmatprep.subr.bf16.mxu0 0
    %224 = vmatpush2.bf16.msra.mxu0 0
    %225 = vmatprep.subr.bf16.mxu0 0
    %226 = vmatpush2.bf16.msra.mxu0 0
    %227 = vmatprep.mubr.bf16.mxu0 0
    %228 = vmatmul.mubr.bf16.gmra.mxu0 %v87
    %v229 = vpop.f32.mrf.mxu0
    %v230 = vadd.f32 %v190, %v229
    %v231 = vpop.f32.mrf.mxu0
    %v232 = vpop.f32.mrf.mxu0
    %v233 = vpop.f32.mrf.mxu0
    %234 = vdwg.mxu0
    %v235 = vld [vmem:[#allocation9] sm:$0x1]
    %v237 = vlaneseq
    %v238 = vshrl.u32 %v237, 7
    %v239 = vsub.s32 0, %v238
    %v240 = vrot.slane %v235, %v239
    %v242 = vadd.f32 %v230, %v240
    %v243 = vtanh.pop %v242
    %244 = vst [vmem:[#allocation12] sm:$0xff] %v243
    // Predicated region
    $region34: #{tpu_custom_call.1} parent=1 // pred_check
      _
    $region35: #{tpu_custom_call.1} parent=1 // pred_check_branch
      %246 = sbr.rel (0) target = $region37
    $region36: #{tpu_custom_call.1} parent=1 // pred_region
      %s248 = ssub.s32 128, 128
      %249 = vsyncadd [#allocation6], %s248
      %s251 = sshll.u32 [#allocation12], 4
      %s252 = int_to_ptr.vmem [resolvable:$true] %s251
      %254 = dma.vmem_to_hbm [thread:$0]  %s252, 128, %s5, [#allocation6]
    $region37: #{tpu_custom_call.1} parent=1 // pred_fallthru
      _
    // Predicated region
    $region38: #{tpu_custom_call.1} parent=1 // pred_check
      _
    $region39: #{tpu_custom_call.1} parent=1 // pred_check_branch
      %256 = sbr.rel (0) target = $region41
    $region40: #{tpu_custom_call.1} parent=1 // pred_region
      %257 = dma.done [#allocation6], 128
    $region41: #{tpu_custom_call.1} parent=1 // pred_fallthru
      _
    %258 = vsyncpa [#allocation5], 1
    %259 = vsyncpa [#allocation8], 1
    %260 = vsyncpa [#allocation11], 1
    %261 = vsyncpa [#allocation6], 1

</llo_original>
